<compile_context>
chip_gen: v5e
topology: v5e:2x2
jax: 0.10.0
libtpu: 0.0.40
codegen_flags: <defaults>
</compile_context>

<pallas_src>
import functools

import jax
import jax.numpy as jnp
from jax.experimental import pallas as pl
from jax.experimental.pallas import tpu as pltpu


def _round_up(x, m):
    return ((x + m - 1) // m) * m


def _disc_contrastive_kernel(label_ref, p_seen_ref, p_unseen_ref, sim_ref,
                             out_ref, *, S, w_seen, w_unseen, small_s):
    # label_ref   : [T, 1]        i32 (VMEM)   0 = background, 1..S = seen class
    # p_seen_ref  : [T, SP1_pad]  f32 (VMEM)   zero-padded columns >= S+1, rows >= N
    # p_unseen_ref: [T, U_pad]    f32 (VMEM)   zero-padded columns >= U,   rows >= N
    # sim_ref     : [S, U_pad]    f32 (VMEM)   zero-padded columns >= U
    # out_ref     : [1, 1]        f32 (VMEM)   resident accumulator = final loss
    i = pl.program_id(0)

    @pl.when(i == 0)
    def _():
        out_ref[...] = jnp.zeros_like(out_ref)

    labels = label_ref[...]                       # [T, 1] int32
    fg = labels >= 1                              # [T, 1] foreground mask
    fg_f = fg.astype(jnp.float32)

    # ---------------- seen branch (one-hot targets over S+1 channels) -------
    # sum BCE = sum_all(-log(1-p)) + sum_{fg rows}(log(1-p_sel) - log(p_sel))
    # Zero-padded entries have p == 0 -> log(1-0) == 0 -> contribute nothing.
    p_seen = p_seen_ref[...]                                          # [T, SP1_pad]
    log1mp = jnp.maximum(jnp.log(1.0 - p_seen), -100.0)               # torch clamp
    seen_partial = -jnp.sum(log1mp)

    col = jax.lax.broadcasted_iota(jnp.int32, p_seen.shape, 1)        # [T, SP1_pad]
    onehot_seen = jnp.where(fg & (col == labels - 1), 1.0, 0.0)       # [T, SP1_pad]
    p_sel = jnp.sum(onehot_seen * p_seen, axis=1, keepdims=True)      # [T, 1]
    logp_sel = jnp.maximum(jnp.log(p_sel), -100.0)
    log1mp_sel = jnp.maximum(jnp.log(1.0 - p_sel), -100.0)
    seen_partial = seen_partial + jnp.sum(fg_f * (log1mp_sel - logp_sel))

    # ---------------- unseen branch (soft targets from similarity rows) -----
    p_unseen = p_unseen_ref[...]                                      # [T, U_pad]
    sim = sim_ref[...]                                                # [S, U_pad]
    if small_s:
        # VPU select-accumulate gather: avoids wasting the MXU on a tiny S.
        y_unseen = jnp.zeros_like(p_unseen)
        for s in range(S):                         # static unroll, S is small
            row = sim[s:s + 1, :]                  # [1, U_pad]
            y_unseen = jnp.where(labels == s + 1, row, y_unseen)
    else:
        # MXU gather: one-hot(label-1) @ sim
        T = labels.shape[0]
        col_s = jax.lax.broadcasted_iota(jnp.int32, (T, S), 1)
        onehot = jnp.where(fg & (col_s == labels - 1), 1.0, 0.0)
        y_unseen = jnp.dot(onehot, sim, preferred_element_type=jnp.float32)

    logp_u = jnp.maximum(jnp.log(p_unseen), -100.0)
    log1mp_u = jnp.maximum(jnp.log(1.0 - p_unseen), -100.0)
    # Padded entries: p == 0, y == 0 -> -(0*(-100) + 1*0) == 0, no masking needed.
    unseen_partial = jnp.sum(-(y_unseen * logp_u + (1.0 - y_unseen) * log1mp_u))

    out_ref[...] += (jnp.float32(w_seen) * seen_partial
                     + jnp.float32(w_unseen) * unseen_partial)


def discriminative_contrastive_loss(cls_score, labels, seen_unseen_similarity,
                                    *, contrastive_weight, loss_weight=1.0,
                                    tile_n=None):
    """Pallas TPU implementation of DiscriminstiveContrastiveLoss.forward."""
    cls_score = cls_score.astype(jnp.float32)
    sim = seen_unseen_similarity.astype(jnp.float32)
    S, U = sim.shape
    N, C = cls_score.shape
    assert C == S + 1 + U, "cls_score channels must equal S+1+U"

    SP1 = S + 1
    SP1_pad = _round_up(SP1, 128)          # lane-dense seen slab
    U_pad = _round_up(U, 128)              # lane-dense unseen slab
    C_pad = SP1_pad + U_pad

    if tile_n is None:
        # Keep the double-buffered per-tile working set to a few MiB so the
        # pipeline fits the scoped-VMEM defaults on v5e (16 MiB) and v7x (32 MiB).
        budget_rows = max(8, (4 * 1024 * 1024) // (4 * C_pad))
        tile_n = min(512, (budget_rows // 8) * 8)
    tile_n = max(8, (min(tile_n, _round_up(N, 8)) // 8) * 8)
    N_pad = _round_up(N, tile_n)

    # Zero-padding: padded probabilities are 0 and padded labels are 0
    # (background), which contributes exactly zero to both clamped BCE sums.
    p_seen = jnp.pad(cls_score[:, :SP1], ((0, N_pad - N), (0, SP1_pad - SP1)))
    p_unseen = jnp.pad(cls_score[:, SP1:], ((0, N_pad - N), (0, U_pad - U)))
    sim_pad = jnp.pad(sim, ((0, 0), (0, U_pad - U)))
    labels_2d = jnp.pad(labels.astype(jnp.int32).reshape(N, 1),
                        ((0, N_pad - N), (0, 0)))

    # Global means + loss weights folded into trace-time constants.
    w_seen = float(loss_weight) / float(N * SP1)
    w_unseen = float(loss_weight) * float(contrastive_weight) / float(N * U)

    grid = (N_pad // tile_n,)
    kernel = functools.partial(_disc_contrastive_kernel,
                               S=S, w_seen=w_seen, w_unseen=w_unseen,
                               small_s=(S <= 16))

    cost = pl.CostEstimate(
        flops=6 * N_pad * C_pad,
        transcendentals=N_pad * SP1_pad + 2 * N_pad + 2 * N_pad * U_pad,
        bytes_accessed=4 * (N_pad * C_pad + N_pad + S * U_pad))

    out = pl.pallas_call(
        kernel,
        out_shape=jax.ShapeDtypeStruct((1, 1), jnp.float32),
        grid_spec=pltpu.PrefetchScalarGridSpec(
            num_scalar_prefetch=0,
            grid=grid,
            in_specs=[
                pl.BlockSpec((tile_n, 1), lambda i: (i, 0)),         # labels
                pl.BlockSpec((tile_n, SP1_pad), lambda i: (i, 0)),   # p_seen
                pl.BlockSpec((tile_n, U_pad), lambda i: (i, 0)),     # p_unseen
                pl.BlockSpec((S, U_pad), lambda i: (0, 0)),          # sim (resident)
            ],
            out_specs=pl.BlockSpec((1, 1), lambda i: (0, 0)),        # accumulator
        ),
        compiler_params=pltpu.CompilerParams(
            dimension_semantics=("arbitrary",)),
        cost_estimate=cost,
    )(labels_2d, p_seen, p_unseen, sim_pad)
    return out[0, 0]


def _reference(cls_score, labels, sim, *, contrastive_weight, loss_weight=1.0):
    """Pure-JAX reference of the PyTorch forward (for sanity checking)."""
    S, U = sim.shape
    fg = (labels >= 1)[:, None]
    bce = lambda p, y: -(y * jnp.maximum(jnp.log(p), -100.0)
                         + (1 - y) * jnp.maximum(jnp.log(1 - p), -100.0))
    y_seen = (jax.nn.one_hot(labels - 1, S + 1) * fg).astype(jnp.float32)
    loss_cls = jnp.mean(bce(cls_score[:, :S + 1], y_seen))
    onehot = (jax.nn.one_hot(labels - 1, S) * fg).astype(jnp.float32)
    y_unseen = onehot @ sim
    loss_con = jnp.mean(bce(cls_score[:, S + 1:], y_unseen))
    return loss_weight * loss_cls + loss_weight * contrastive_weight * loss_con


if __name__ == "__main__":
    key = jax.random.PRNGKey(0)
    contrastive_weight = 0.5
    loss_weight = 1.0

    # ---- case 1: small canonical shapes, single tile ------------------------
    k1, k2, k3 = jax.random.split(key, 3)
    N, S, U = 8, 4, 4
    C = S + 1 + U
    cls_score = jax.nn.sigmoid(jax.random.normal(k1, (N, C), jnp.float32))
    labels = jax.random.randint(k2, (N,), 0, S + 1, dtype=jnp.int32)
    seen_unseen_similarity = jax.random.uniform(k3, (S, U), jnp.float32)

    out = discriminative_contrastive_loss(
        cls_score, labels, seen_unseen_similarity,
        contrastive_weight=contrastive_weight, loss_weight=loss_weight)
    out = jax.block_until_ready(out)
    ref = _reference(cls_score, labels, seen_unseen_similarity,
                     contrastive_weight=contrastive_weight,
                     loss_weight=loss_weight)
    assert jnp.allclose(out, ref, rtol=1e-5, atol=1e-5), (out, ref)

    # ---- case 2: irregular shapes, forced multi-tile grid (padding + accum) -
    k4, k5, k6 = jax.random.split(jax.random.PRNGKey(1), 3)
    N2, S2, U2 = 24, 3, 5
    C2 = S2 + 1 + U2
    cls_score2 = jax.nn.sigmoid(jax.random.normal(k4, (N2, C2), jnp.float32))
    labels2 = jax.random.randint(k5, (N2,), 0, S2 + 1, dtype=jnp.int32)
    sim2 = jax.random.uniform(k6, (S2, U2), jnp.float32)

    out2 = discriminative_contrastive_loss(
        cls_score2, labels2, sim2,
        contrastive_weight=contrastive_weight, loss_weight=loss_weight,
        tile_n=8)   # 3 grid steps -> exercises the accumulator path
    out2 = jax.block_until_ready(out2)
    ref2 = _reference(cls_score2, labels2, sim2,
                      contrastive_weight=contrastive_weight,
                      loss_weight=loss_weight)
    assert jnp.allclose(out2, ref2, rtol=1e-5, atol=1e-5), (out2, ref2)

    print("KERNEL_OK")
</pallas_src>

<mosaic_0001>
module attributes {stable_mosaic.version = 11 : i64} {
  func.func @_disc_contrastive_kernel(%arg0: i32, %arg1: memref<8x1xi32, #tpu.memory_space<vmem>>, %arg2: memref<8x128xf32, #tpu.memory_space<vmem>>, %arg3: memref<8x128xf32, #tpu.memory_space<vmem>>, %arg4: memref<4x128xf32, #tpu.memory_space<vmem>>, %arg5: memref<1x1xf32, #tpu.memory_space<vmem>>) attributes {dimension_semantics = [#tpu.dimension_semantics<arbitrary>], iteration_bounds = array<i64: 1>, scalar_prefetch = 0 : i64, scratch_operands = 0 : i64, tpu.core_type = #tpu.core_type<tc>, window_params = [{transform_indices = @transform_0, window_bounds = array<i64: 8, 1>}, {transform_indices = @transform_1, window_bounds = array<i64: 8, 128>}, {transform_indices = @transform_2, window_bounds = array<i64: 8, 128>}, {pipeline_mode = #tpu.pipeline_mode<synchronous>, transform_indices = @transform_3, window_bounds = array<i64: 4, 128>}, {pipeline_mode = #tpu.pipeline_mode<synchronous>, transform_indices = @transform_4, window_bounds = array<i64: 1, 1>}]} {
    %c0_i32 = arith.constant 0 : i32
    %0 = arith.cmpi eq, %arg0, %c0_i32 : i32
    %1 = arith.extui %0 : i1 to i32
    %c0_i32_0 = arith.constant 0 : i32
    %2 = arith.cmpi ne, %1, %c0_i32_0 : i32
    scf.if %2 {
      %cst_33 = arith.constant 0.000000e+00 : f32
      %108 = vector.broadcast %cst_33 : f32 to vector<1x1xf32>
      %c0_34 = arith.constant 0 : index
      %c0_35 = arith.constant 0 : index
      %109 = vector.load %arg5[%c0_34, %c0_35] : memref<1x1xf32, #tpu.memory_space<vmem>>, vector<1x1xf32>
      tpu.vector_store %arg5[%c0_34, %c0_35], %108 {strides = array<i32>} : memref<1x1xf32, #tpu.memory_space<vmem>>, vector<1x1xf32>,
    } else {
    }
    %c0 = arith.constant 0 : index
    %c0_1 = arith.constant 0 : index
    %3 = vector.load %arg1[%c0, %c0_1] : memref<8x1xi32, #tpu.memory_space<vmem>>, vector<8x1xi32>
    %c1_i32 = arith.constant 1 : i32
    %4 = vector.broadcast %c1_i32 : i32 to vector<8x1xi32>
    %5 = arith.cmpi sge, %3, %4 : vector<8x1xi32>
    %6 = arith.extui %5 : vector<8x1xi1> to vector<8x1xi32>
    %7 = arith.sitofp %6 : vector<8x1xi32> to vector<8x1xf32>
    %c0_2 = arith.constant 0 : index
    %c0_3 = arith.constant 0 : index
    %8 = vector.load %arg2[%c0_2, %c0_3] : memref<8x128xf32, #tpu.memory_space<vmem>>, vector<8x128xf32>
    %cst = arith.constant 1.000000e+00 : f32
    %9 = vector.broadcast %cst : f32 to vector<8x128xf32>
    %10 = arith.subf %9, %8 : vector<8x128xf32>
    %11 = math.log %10 : vector<8x128xf32>
    %cst_4 = arith.constant -1.000000e+02 : f32
    %12 = vector.broadcast %cst_4 : f32 to vector<8x128xf32>
    %13 = arith.maximumf %11, %12 : vector<8x128xf32>
    %14 = vector.shape_cast %13 : vector<8x128xf32> to vector<1x8x128xf32>
    %cst_5 = arith.constant dense<0.000000e+00> : vector<1xf32>
    %15 = vector.multi_reduction <add>, %14, %cst_5 [1, 2] : vector<1x8x128xf32> to vector<1xf32>
    %16 = vector.shape_cast %15 : vector<1xf32> to vector<1x1x1xf32>
    %17 = vector.extract %16[0, 0, 0] : f32 from vector<1x1x1xf32>
    %cst_6 = arith.constant 0.000000e+00 : f32
    %18 = arith.subf %cst_6, %17 : f32
    %19 = tpu.iota {dimensions = array<i32: 1>} : vector<8x128xi32>
    %c1_i32_7 = arith.constant 1 : i32
    %20 = vector.broadcast %c1_i32_7 : i32 to vector<8x1xi32>
    %21 = arith.subi %3, %20 : vector<8x1xi32>
    %22 = vector.broadcast %21 : vector<8x1xi32> to vector<8x128xi32>
    %23 = arith.cmpi eq, %19, %22 : vector<8x128xi32>
    %24 = vector.broadcast %5 : vector<8x1xi1> to vector<8x128xi1>
    %25 = arith.andi %24, %23 : vector<8x128xi1>
    %cst_8 = arith.constant 1.000000e+00 : f32
    %cst_9 = arith.constant 0.000000e+00 : f32
    %26 = vector.broadcast %cst_8 : f32 to vector<8x128xf32>
    %27 = vector.broadcast %cst_9 : f32 to vector<8x128xf32>
    %28 = arith.select %25, %26, %27 : vector<8x128xi1>, vector<8x128xf32>
    %29 = arith.mulf %28, %8 : vector<8x128xf32>
    %cst_10 = arith.constant dense<0.000000e+00> : vector<8xf32>
    %30 = vector.multi_reduction <add>, %29, %cst_10 [1] : vector<8x128xf32> to vector<8xf32>
    %31 = vector.shape_cast %30 : vector<8xf32> to vector<8x1xf32>
    %32 = math.log %31 : vector<8x1xf32>
    %cst_11 = arith.constant -1.000000e+02 : f32
    %33 = vector.broadcast %cst_11 : f32 to vector<8x1xf32>
    %34 = arith.maximumf %32, %33 : vector<8x1xf32>
    %cst_12 = arith.constant 1.000000e+00 : f32
    %35 = vector.broadcast %cst_12 : f32 to vector<8x1xf32>
    %36 = arith.subf %35, %31 : vector<8x1xf32>
    %37 = math.log %36 : vector<8x1xf32>
    %cst_13 = arith.constant -1.000000e+02 : f32
    %38 = vector.broadcast %cst_13 : f32 to vector<8x1xf32>
    %39 = arith.maximumf %37, %38 : vector<8x1xf32>
    %40 = arith.subf %39, %34 : vector<8x1xf32>
    %41 = arith.mulf %7, %40 : vector<8x1xf32>
    %42 = vector.shape_cast %41 : vector<8x1xf32> to vector<1x8x1xf32>
    %cst_14 = arith.constant dense<0.000000e+00> : vector<1xf32>
    %43 = vector.multi_reduction <add>, %42, %cst_14 [1, 2] : vector<1x8x1xf32> to vector<1xf32>
    %44 = vector.shape_cast %43 : vector<1xf32> to vector<1x1x1xf32>
    %45 = vector.extract %44[0, 0, 0] : f32 from vector<1x1x1xf32>
    %46 = arith.addf %18, %45 : f32
    %c0_15 = arith.constant 0 : index
    %c0_16 = arith.constant 0 : index
    %47 = vector.load %arg3[%c0_15, %c0_16] : memref<8x128xf32, #tpu.memory_space<vmem>>, vector<8x128xf32>
    %c0_17 = arith.constant 0 : index
    %c0_18 = arith.constant 0 : index
    %48 = vector.load %arg4[%c0_17, %c0_18] : memref<4x128xf32, #tpu.memory_space<vmem>>, vector<4x128xf32>
    %cst_19 = arith.constant 0.000000e+00 : f32
    %49 = vector.broadcast %cst_19 : f32 to vector<8x128xf32>
    %50 = vector.extract_strided_slice %48 {offsets = [0, 0], sizes = [1, 128], strides = [1, 1]} : vector<4x128xf32> to vector<1x128xf32>
    %c1_i32_20 = arith.constant 1 : i32
    %51 = vector.broadcast %c1_i32_20 : i32 to vector<8x1xi32>
    %52 = arith.cmpi eq, %3, %51 : vector<8x1xi32>
    %53 = vector.shape_cast %52 : vector<8x1xi1> to vector<8x1xi1>
    %54 = vector.broadcast %53 : vector<8x1xi1> to vector<8x128xi1>
    %55 = vector.shape_cast %50 : vector<1x128xf32> to vector<1x128xf32>
    %56 = vector.broadcast %55 : vector<1x128xf32> to vector<8x128xf32>
    %57 = arith.select %54, %56, %49 : vector<8x128xi1>, vector<8x128xf32>
    %58 = vector.extract_strided_slice %48 {offsets = [1, 0], sizes = [1, 128], strides = [1, 1]} : vector<4x128xf32> to vector<1x128xf32>
    %c2_i32 = arith.constant 2 : i32
    %59 = vector.broadcast %c2_i32 : i32 to vector<8x1xi32>
    %60 = arith.cmpi eq, %3, %59 : vector<8x1xi32>
    %61 = vector.shape_cast %60 : vector<8x1xi1> to vector<8x1xi1>
    %62 = vector.broadcast %61 : vector<8x1xi1> to vector<8x128xi1>
    %63 = vector.shape_cast %58 : vector<1x128xf32> to vector<1x128xf32>
    %64 = vector.broadcast %63 : vector<1x128xf32> to vector<8x128xf32>
    %65 = arith.select %62, %64, %57 : vector<8x128xi1>, vector<8x128xf32>
    %66 = vector.extract_strided_slice %48 {offsets = [2, 0], sizes = [1, 128], strides = [1, 1]} : vector<4x128xf32> to vector<1x128xf32>
    %c3_i32 = arith.constant 3 : i32
    %67 = vector.broadcast %c3_i32 : i32 to vector<8x1xi32>
    %68 = arith.cmpi eq, %3, %67 : vector<8x1xi32>
    %69 = vector.shape_cast %68 : vector<8x1xi1> to vector<8x1xi1>
    %70 = vector.broadcast %69 : vector<8x1xi1> to vector<8x128xi1>
    %71 = vector.shape_cast %66 : vector<1x128xf32> to vector<1x128xf32>
    %72 = vector.broadcast %71 : vector<1x128xf32> to vector<8x128xf32>
    %73 = arith.select %70, %72, %65 : vector<8x128xi1>, vector<8x128xf32>
    %74 = vector.extract_strided_slice %48 {offsets = [3, 0], sizes = [1, 128], strides = [1, 1]} : vector<4x128xf32> to vector<1x128xf32>
    %c4_i32 = arith.constant 4 : i32
    %75 = vector.broadcast %c4_i32 : i32 to vector<8x1xi32>
    %76 = arith.cmpi eq, %3, %75 : vector<8x1xi32>
    %77 = vector.shape_cast %76 : vector<8x1xi1> to vector<8x1xi1>
    %78 = vector.broadcast %77 : vector<8x1xi1> to vector<8x128xi1>
    %79 = vector.shape_cast %74 : vector<1x128xf32> to vector<1x128xf32>
    %80 = vector.broadcast %79 : vector<1x128xf32> to vector<8x128xf32>
    %81 = arith.select %78, %80, %73 : vector<8x128xi1>, vector<8x128xf32>
    %82 = math.log %47 : vector<8x128xf32>
    %cst_21 = arith.constant -1.000000e+02 : f32
    %83 = vector.broadcast %cst_21 : f32 to vector<8x128xf32>
    %84 = arith.maximumf %82, %83 : vector<8x128xf32>
    %cst_22 = arith.constant 1.000000e+00 : f32
    %85 = vector.broadcast %cst_22 : f32 to vector<8x128xf32>
    %86 = arith.subf %85, %47 : vector<8x128xf32>
    %87 = math.log %86 : vector<8x128xf32>
    %cst_23 = arith.constant -1.000000e+02 : f32
    %88 = vector.broadcast %cst_23 : f32 to vector<8x128xf32>
    %89 = arith.maximumf %87, %88 : vector<8x128xf32>
    %90 = arith.mulf %81, %84 : vector<8x128xf32>
    %cst_24 = arith.constant 1.000000e+00 : f32
    %91 = vector.broadcast %cst_24 : f32 to vector<8x128xf32>
    %92 = arith.subf %91, %81 : vector<8x128xf32>
    %93 = arith.mulf %92, %89 : vector<8x128xf32>
    %94 = arith.addf %90, %93 : vector<8x128xf32>
    %cst_25 = arith.constant 0.000000e+00 : f32
    %95 = vector.broadcast %cst_25 : f32 to vector<8x128xf32>
    %96 = arith.subf %95, %94 : vector<8x128xf32>
    %97 = vector.shape_cast %96 : vector<8x128xf32> to vector<1x8x128xf32>
    %cst_26 = arith.constant dense<0.000000e+00> : vector<1xf32>
    %98 = vector.multi_reduction <add>, %97, %cst_26 [1, 2] : vector<1x8x128xf32> to vector<1xf32>
    %99 = vector.shape_cast %98 : vector<1xf32> to vector<1x1x1xf32>
    %100 = vector.extract %99[0, 0, 0] : f32 from vector<1x1x1xf32>
    %c0_27 = arith.constant 0 : index
    %c0_28 = arith.constant 0 : index
    %101 = vector.load %arg5[%c0_27, %c0_28] : memref<1x1xf32, #tpu.memory_space<vmem>>, vector<1x1xf32>
    %cst_29 = arith.constant 2.500000e-02 : f32
    %102 = arith.mulf %cst_29, %46 : f32
    %cst_30 = arith.constant 1.562500e-02 : f32
    %103 = arith.mulf %cst_30, %100 : f32
    %104 = arith.addf %102, %103 : f32
    %105 = vector.broadcast %104 : f32 to vector<1x1xf32>
    %106 = arith.addf %101, %105 : vector<1x1xf32>
    %c0_31 = arith.constant 0 : index
    %c0_32 = arith.constant 0 : index
    %107 = vector.load %arg5[%c0_31, %c0_32] : memref<1x1xf32, #tpu.memory_space<vmem>>, vector<1x1xf32>
    tpu.vector_store %arg5[%c0_31, %c0_32], %106 {strides = array<i32>} : memref<1x1xf32, #tpu.memory_space<vmem>>, vector<1x1xf32>,
    return
  }
  func.func @transform_0(%arg0: i32) -> (i32, i32) {
    %c0_i32 = arith.constant 0 : i32
    %c0_i32_0 = arith.constant 0 : i32
    return %arg0, %c0_i32 : i32, i32
  }
  func.func @transform_1(%arg0: i32) -> (i32, i32) {
    %c0_i32 = arith.constant 0 : i32
    %c0_i32_0 = arith.constant 0 : i32
    return %arg0, %c0_i32 : i32, i32
  }
  func.func @transform_2(%arg0: i32) -> (i32, i32) {
    %c0_i32 = arith.constant 0 : i32
    %c0_i32_0 = arith.constant 0 : i32
    return %arg0, %c0_i32 : i32, i32
  }
  func.func @transform_3(%arg0: i32) -> (i32, i32) {
    %c0_i32 = arith.constant 0 : i32
    %c0_i32_0 = arith.constant 0 : i32
    %c0_i32_1 = arith.constant 0 : i32
    return %c0_i32, %c0_i32_0 : i32, i32
  }
  func.func @transform_4(%arg0: i32) -> (i32, i32) {
    %c0_i32 = arith.constant 0 : i32
    %c0_i32_0 = arith.constant 0 : i32
    %c0_i32_1 = arith.constant 0 : i32
    return %c0_i32, %c0_i32_0 : i32, i32
  }
}

</mosaic_0001>

<llo_original>
// kernel: tpu_custom_call.1
$region0: #{tpu_custom_call.1}
  #allocation0 [shape = 'u32[]', space=smem, size = 0x4, offset = 0x4, fixed_abs, tag = 'smem constant byte address 0x4 - core index']
  #allocation1 [shape = 'u32[72,128]{1,0:T(1,128)}', space=vmem, size = 0x9000, scoped, tag = 'internal scratch']
  %s0 = inlined_call_operand.vmem [shape: s32[8,1], index: 0, kind: input, shape index: {}]
  %s1 = inlined_call_operand.vmem [shape: f32[8,128], index: 1, kind: input, shape index: {}]
  %s2 = inlined_call_operand.hbm [shape: f32[8,128], index: 2, kind: input, shape index: {}]
  %s3 = inlined_call_operand.hbm [shape: f32[4,128], index: 3, kind: input, shape index: {}]
  %s4 = inlined_call_operand.hbm [shape: f32[1,1], index: 4, kind: output, shape index: {}]
  %s5 = sld [smem:[#allocation0]]
  $region38: #{tpu_custom_call.1} parent=0
    _
  %s7 = ssub.s32 1, %s5
  %s8 = scalar_select 0, %s7, %s5
  $region1: #{tpu_custom_call.1} parent=0
    #allocation2 [shape = 'u8[4096]{0}', space=vmem, size = 0x1000, scoped, tag = 'input window, operand 2, single buffered']
    #allocation3 [shape = 's32[1]{0}', space=sflag, size = 0x4, scoped, tag = 'scoped memory for tpu_custom_call.1']
    #allocation4 [shape = 's32[1]{0}', space=sflag, size = 0x4, scoped, tag = 'scoped memory for tpu_custom_call.1']
    #allocation5 [shape = 'u8[2048]{0}', space=vmem, size = 0x800, scoped, tag = 'input window, operand 3, single buffered']
    #allocation6 [shape = 's32[1]{0}', space=sflag, size = 0x4, scoped, tag = 'scoped memory for tpu_custom_call.1']
    #allocation7 [shape = 'u8[512]{0}', space=vmem, size = 0x400, scoped, tag = 'output window, operand 0, single buffered']
    %9 = vsyncpa [#allocation3], 0
    %10 = vsyncpa [#allocation6], 0
    %11 = vsyncpa [#allocation4], 0
    // Predicated region
    $region2: #{tpu_custom_call.1} parent=1 // pred_check
      _
    $region3: #{tpu_custom_call.1} parent=1 // pred_check_branch
      %13 = sbr.rel (0) target = $region5
    $region4: #{tpu_custom_call.1} parent=1 // pred_region
      _
    $region5: #{tpu_custom_call.1} parent=1 // pred_fallthru
      _
    // Predicated region
    $region6: #{tpu_custom_call.1} parent=1 // pred_check
      _
    $region7: #{tpu_custom_call.1} parent=1 // pred_check_branch
      %15 = sbr.rel (0) target = $region9
    $region8: #{tpu_custom_call.1} parent=1 // pred_region
      _
    $region9: #{tpu_custom_call.1} parent=1 // pred_fallthru
      _
    // Predicated region
    $region10: #{tpu_custom_call.1} parent=1 // pred_check
      _
    $region11: #{tpu_custom_call.1} parent=1 // pred_check_branch
      %17 = sbr.rel (0) target = $region13
    $region12: #{tpu_custom_call.1} parent=1 // pred_region
      %19 = vsyncadd [#allocation3], 0
      %s21 = sshll.u32 %s2, 4
      %s22 = int_to_ptr.hbm [resolvable:$true] %s21
      %s23 = sshll.u32 [#allocation2], 4
      %s24 = int_to_ptr.vmem [resolvable:$true] %s23
      %26 = dma.hbm_to_vmem [thread:$0]  %s22, 128, %s24, [#allocation3]
    $region13: #{tpu_custom_call.1} parent=1 // pred_fallthru
      _
    // Predicated region
    $region14: #{tpu_custom_call.1} parent=1 // pred_check
      _
    $region15: #{tpu_custom_call.1} parent=1 // pred_check_branch
      %28 = sbr.rel (0) target = $region17
    $region16: #{tpu_custom_call.1} parent=1 // pred_region
      %30 = vsyncadd [#allocation6], 0
      %s32 = sshll.u32 %s3, 4
      %s33 = int_to_ptr.hbm [resolvable:$true] %s32
      %s34 = sshll.u32 [#allocation5], 4
      %s35 = int_to_ptr.vmem [resolvable:$true] %s34
      %37 = dma.hbm_to_vmem [thread:$0]  %s33, 64, %s35, [#allocation6]
    $region17: #{tpu_custom_call.1} parent=1 // pred_fallthru
      _
    // Predicated region
    $region18: #{tpu_custom_call.1} parent=1 // pred_check
      _
    $region19: #{tpu_custom_call.1} parent=1 // pred_check_branch
      %39 = sbr.rel (0) target = $region21
    $region20: #{tpu_custom_call.1} parent=1 // pred_region
      %41 = dma.done [#allocation3], 128
    $region21: #{tpu_custom_call.1} parent=1 // pred_fallthru
      _
    // Predicated region
    $region22: #{tpu_custom_call.1} parent=1 // pred_check
      _
    $region23: #{tpu_custom_call.1} parent=1 // pred_check_branch
      %43 = sbr.rel (0) target = $region25
    $region24: #{tpu_custom_call.1} parent=1 // pred_region
      %45 = dma.done [#allocation6], 64
    $region25: #{tpu_custom_call.1} parent=1 // pred_fallthru
      _
    %p46 = scmp.eq.s32.totalorder 0, 0
    // Predicated region
    $region26: #{tpu_custom_call.1} parent=1 // pred_check
      %p47 = pneg %p46
    $region27: #{tpu_custom_call.1} parent=1 // pred_check_branch
      %49 = sbr.rel (%p47) target = $region29
    $region28: #{tpu_custom_call.1} parent=1 // pred_region
      %vm50 = vcmask 0
      %51 = vst.msk [vmem:[#allocation7] sm:$0x1] %vm50, 0.0
    $region29: #{tpu_custom_call.1} parent=1 // pred_fallthru
      _
    %v52 = vld [vmem:[%s0] sm:$0xff]
    %vm53 = vcmp.ge.s32.totalorder %v52, 1
    %v54 = vsel %vm53, 1, 0
    %v55 = vcvt.s32.f32 %v54
    %v56 = vld [vmem:[%s1] sm:$0xff]
    %v57 = vsub.f32 1.0, %v56
    %v58 = vlog2.pop %v57
    %v59 = vmul.f32 %v58, 0.6931472
    %v60 = vmax.f32 %v59, -100.0
    %61 = vadd.xlane.f32.xlu0 %v60
    %v62 = vpop.xlane.xlu0 %61
    %v63 = vrot.slane %v62, 4
    %v64 = vadd.f32 %v62, %v63
    %v65 = vrot.slane %v64, 2
    %v66 = vadd.f32 %v64, %v65
    %v67 = vrot.slane %v66, 1
    %v68 = vadd.f32 %v66, %v67
    %s69 = vtos %v68
    %s70 = ssub.f32 0.0, %s69
    %v71 = vlaneseq
    %v72 = vand.u32 %v71, 127
    %v73 = vsub.s32 %v52, 1
    %74 = vset.pattern.permute.xlu0 0
    %75 = vperm.xlu0 %74, %v73
    %v76 = vpop.permute.xlu0 %75
    %vm77 = vcmp.eq.s32.totalorder %v72, %v76
    %78 = vset.pattern.permute.xlu0 0
    %79 = vperm.xlu0 %78, %v54
    %v80 = vpop.permute.xlu0 %79
    %vm81 = vcmp.eq.s32.totalorder %v80, 1
    %vm82 = vmand %vm81, %vm77
    %v83 = vsel %vm82, 1.0, 0.0
    %v84 = vmul.f32 %v83, %v56
    %85 = vadd.xlane.f32.xlu0 %v84
    %v86 = vpop.xlane.xlu0 %85
    %v87 = vlog2.pop %v86
    %v88 = vmul.f32 %v87, 0.6931472
    %v89 = vmax.f32 %v88, -100.0
    %v90 = vsub.f32 1.0, %v86
    %v91 = vlog2.pop %v90
    %v92 = vmul.f32 %v91, 0.6931472
    %v93 = vmax.f32 %v92, -100.0
    %v94 = vsub.f32 %v93, %v89
    %v95 = vmul.f32 %v55, %v94
    %vm96 = vcmask 7168
    %v97 = vsel %vm96, %v95, 0.0
    %98 = vadd.xlane.f32.xlu0 %v97
    %v99 = vpop.xlane.xlu0 %98
    %v100 = vrot.slane %v99, 4
    %v101 = vadd.f32 %v99, %v100
    %v102 = vrot.slane %v101, 2
    %v103 = vadd.f32 %v101, %v102
    %v104 = vrot.slane %v103, 1
    %v105 = vadd.f32 %v103, %v104
    %s106 = vtos %v105
    %s107 = sadd.f32 %s70, %s106
    %v108 = vld [vmem:[#allocation2] sm:$0xff]
    %v109 = vld [vmem:[#allocation5] sm:$0xf]
    %vm110 = vcmp.eq.s32.totalorder %v52, 1
    %v111 = vsel %vm110, 1, 0
    %112 = vset.pattern.permute.xlu0 0
    %113 = vperm.xlu0 %112, %v111
    %v114 = vpop.permute.xlu0 %113
    %vm115 = vcmp.eq.s32.totalorder %v114, 1
    %v116 = vperm.slane %v109, 0
    %v117 = vsel %vm115, %v116, 0.0
    %vm118 = vcmp.eq.s32.totalorder %v52, 2
    %v119 = vsel %vm118, 1, 0
    %120 = vset.pattern.permute.xlu0 0
    %121 = vperm.xlu0 %120, %v119
    %v122 = vpop.permute.xlu0 %121
    %vm123 = vcmp.eq.s32.totalorder %v122, 1
    %v124 = vperm.slane %v109, 1
    %v125 = vsel %vm123, %v124, %v117
    %vm126 = vcmp.eq.s32.totalorder %v52, 3
    %v127 = vsel %vm126, 1, 0
    %128 = vset.pattern.permute.xlu0 0
    %129 = vperm.xlu0 %128, %v127
    %v130 = vpop.permute.xlu0 %129
    %vm131 = vcmp.eq.s32.totalorder %v130, 1
    %v132 = vperm.slane %v109, 2
    %v133 = vsel %vm131, %v132, %v125
    %vm134 = vcmp.eq.s32.totalorder %v52, 4
    %v135 = vsel %vm134, 1, 0
    %136 = vset.pattern.permute.xlu0 0
    %137 = vperm.xlu0 %136, %v135
    %v138 = vpop.permute.xlu0 %137
    %vm139 = vcmp.eq.s32.totalorder %v138, 1
    %v140 = vperm.slane %v109, 3
    %v141 = vsel %vm139, %v140, %v133
    %v142 = vlog2.pop %v108
    %v143 = vmul.f32 %v142, 0.6931472
    %v144 = vmax.f32 %v143, -100.0
    %v145 = vsub.f32 1.0, %v108
    %v146 = vlog2.pop %v145
    %v147 = vmul.f32 %v146, 0.6931472
    %v148 = vmax.f32 %v147, -100.0
    %v149 = vmul.f32 %v141, %v144
    %v150 = vsub.f32 1.0, %v141
    %v151 = vmul.f32 %v150, %v148
    %v152 = vadd.f32 %v149, %v151
    %v153 = vsub.f32 0.0, %v152
    %154 = vadd.xlane.f32.xlu0 %v153
    %v155 = vpop.xlane.xlu0 %154
    %v156 = vrot.slane %v155, 4
    %v157 = vadd.f32 %v155, %v156
    %v158 = vrot.slane %v157, 2
    %v159 = vadd.f32 %v157, %v158
    %v160 = vrot.slane %v159, 1
    %v161 = vadd.f32 %v159, %v160
    %s162 = vtos %v161
    %v163 = vld [vmem:[#allocation7] sm:$0x1]
    %s164 = smul.f32 %s107, 0.025
    %s165 = smul.f32 %s162, 0.015625
    %s166 = sadd.f32 %s164, %s165
    %v167 = vstv %s166
    %v168 = vadd.f32 %v163, %v167
    %vm169 = vcmask 0
    %170 = vst.msk [vmem:[#allocation7] sm:$0x1] %vm169, %v168
    // Predicated region
    $region30: #{tpu_custom_call.1} parent=1 // pred_check
      _
    $region31: #{tpu_custom_call.1} parent=1 // pred_check_branch
      %172 = sbr.rel (0) target = $region33
    $region32: #{tpu_custom_call.1} parent=1 // pred_region
      %174 = vsyncadd [#allocation4], 0
      %s176 = sshll.u32 [#allocation7], 4
      %s177 = int_to_ptr.vmem [resolvable:$true] %s176
      %s178 = sshll.u32 %s4, 4
      %s179 = int_to_ptr.hbm [resolvable:$true] %s178
      %181 = dma.vmem_to_hbm [thread:$0]  %s177, 16, %s179, [#allocation4]
    $region33: #{tpu_custom_call.1} parent=1 // pred_fallthru
      _
    // Predicated region
    $region34: #{tpu_custom_call.1} parent=1 // pred_check
      _
    $region35: #{tpu_custom_call.1} parent=1 // pred_check_branch
      %183 = sbr.rel (0) target = $region37
    $region36: #{tpu_custom_call.1} parent=1 // pred_region
      %185 = dma.done [#allocation4], 16
    $region37: #{tpu_custom_call.1} parent=1 // pred_fallthru
      _
    %186 = vsyncpa [#allocation3], 1
    %187 = vsyncpa [#allocation6], 1
    %188 = vsyncpa [#allocation4], 1

</llo_original>
